<compile_context>
chip_gen: v7x
topology: tpu7x:2x2x1
jax: 0.10.0
libtpu: 0.0.40
codegen_flags: <defaults>
</compile_context>

<pallas_src>
import jax
import jax.numpy as jnp
from jax.experimental import pallas as pl
from jax.experimental.pallas import tpu as pltpu

_LANE = 128
_MIN_PALLAS_BYTES = 256 * 1024  # below this, the fusible XLA add always wins


def _round_up(v: int, m: int) -> int:
    return ((v + m - 1) // m) * m


def _target_block_bytes() -> int:
    """Per-generation DMA block size; defaults to 4 MiB (v6e sweet spot)."""
    try:
        kind = jax.devices()[0].device_kind.lower()
    except Exception:
        return 4 << 20
    if "v5 lite" in kind or "v5e" in kind or "v5lite" in kind:
        return 2 << 20  # v5e: ~0.8 TB/s, 1-2 MiB blocks already at roofline
    if "v7" in kind:
        return 8 << 20  # v7x: ~3.2 TB/s, bigger blocks hide per-step overhead
    return 4 << 20      # v6e / unknown


def _shift_kernel(shift_ref, x_ref, o_ref):
    # shift lives in SMEM (scalar load per grid step, free under the DMA bound).
    # bf16/int inputs promote through f32/i32 for the add, then cast back;
    # the extra VPU cast is fully hidden by the HBM DMA.
    o_ref[...] = (x_ref[...] + shift_ref[0, 0]).astype(o_ref.dtype)


def shift_forward(x: jax.Array, shift, *, donate: bool = False,
                  force_pallas: bool = False) -> jax.Array:
    """Equivalent of Shift(shift).forward(x) == x + shift, any input shape."""
    orig_shape, orig_dtype = x.shape, x.dtype
    n = x.size
    if n == 0:
        return x

    sdtype = jnp.float32 if jnp.issubdtype(orig_dtype, jnp.floating) else jnp.int32
    shift_arr = jnp.asarray(shift, dtype=sdtype).reshape(1, 1)

    itemsize = jnp.dtype(orig_dtype).itemsize
    nbytes = n * itemsize
    ragged = (n % _LANE) != 0

    if ragged or (nbytes < _MIN_PALLAS_BYTES and not force_pallas):
        # Ragged or tiny tensors: plain XLA add. Fuses with producers/consumers,
        # exactly one HBM pass -- strictly better than padding/slicing around a
        # standalone kernel (which cost ~3x traffic in the previous version).
        return (x + shift_arr[0, 0]).astype(orig_dtype)

    rows = n // _LANE
    x2d = x.reshape(rows, _LANE)  # lane-dense view, no data movement

    # dtype-aware cap so each DMA block is ~target bytes regardless of width
    # (multiple of 32 rows -> satisfies sublane packing for bf16/int8 too).
    max_row_tile = max(8, (_target_block_bytes() // (_LANE * itemsize)) // 32 * 32)

    if rows <= 1024:
        # Full-extent block (exempt from the (8,128) divisibility rule).
        row_tile = rows
    else:
        # >= 4 programs (even count, so v7x's 2 TensorCores split evenly); each
        # block >= 512 rows so the DMA dwarfs the ~0.35 us/step grid overhead.
        n_prog = max(4, pl.cdiv(rows, max_row_tile))
        if n_prog % 2:
            n_prog += 1
        row_tile = min(max_row_tile, max(512, _round_up(pl.cdiv(rows, n_prog), 8)))

    grid = (pl.cdiv(rows, row_tile),)
    block_bytes = row_tile * _LANE * itemsize
    # 2 in-bufs + 2 out-bufs plus headroom; v7x 8 MiB blocks -> 48 MiB (< 64 MiB).
    vmem_limit = int(max(32 * 1024 * 1024, 6 * block_bytes))

    out2d = pl.pallas_call(
        _shift_kernel,
        out_shape=jax.ShapeDtypeStruct((rows, _LANE), orig_dtype),
        grid=grid,
        in_specs=[
            pl.BlockSpec(memory_space=pltpu.MemorySpace.SMEM),   # shift scalar
            pl.BlockSpec((row_tile, _LANE), lambda i: (i, 0)),   # lane-dense slab
        ],
        out_specs=pl.BlockSpec((row_tile, _LANE), lambda i: (i, 0)),
        input_output_aliases={1: 0} if donate else {},
        compiler_params=pltpu.CompilerParams(
            dimension_semantics=("parallel",),  # megacore / 2-TC sharding
            vmem_limit_bytes=vmem_limit,
        ),
    )(shift_arr, x2d)

    return out2d.reshape(orig_shape)


if __name__ == "__main__":
    key = jax.random.PRNGKey(0)

    # 1) The module's canonical small NCHW case; force the Pallas path so the
    #    kernel itself is exercised (naturally this size would take XLA).
    B, C, H, W = 2, 4, 16, 16
    x = jax.random.normal(key, (B, C, H, W), dtype=jnp.float32)
    shift = 0.5
    y = shift_forward(x, shift, force_pallas=True)
    jax.block_until_ready(y)
    assert y.shape == x.shape and y.dtype == x.dtype
    assert jnp.allclose(y, x + shift, atol=1e-6)

    # 2) A medium aligned tensor that takes the natural multi-block Pallas path
    #    (rows = 4096 -> 4 programs of ~1024 rows on v6e defaults).
    x_big = jax.random.normal(jax.random.PRNGKey(2), (8, 64, 32, 32), dtype=jnp.float32)
    y_big = shift_forward(x_big, 0.125)
    jax.block_until_ready(y_big)
    assert y_big.shape == x_big.shape and y_big.dtype == x_big.dtype
    assert jnp.allclose(y_big, x_big + 0.125, atol=1e-6)

    # 3) Lane-ragged input: fused XLA fallback (no pad/slice extra passes).
    x_ragged = jax.random.normal(jax.random.PRNGKey(1), (3, 5, 7), dtype=jnp.float32)
    y_ragged = shift_forward(x_ragged, -1.25)
    jax.block_until_ready(y_ragged)
    assert y_ragged.shape == x_ragged.shape and y_ragged.dtype == x_ragged.dtype
    assert jnp.allclose(y_ragged, x_ragged - 1.25, atol=1e-6)

    print("KERNEL_OK")
</pallas_src>

<mosaic_0001>
module attributes {stable_mosaic.version = 11 : i64} {
  func.func @_shift_kernel(%arg0: i32, %arg1: memref<1x1xf32, #tpu.memory_space<smem>>, %arg2: memref<16x128xf32, #tpu.memory_space<vmem>>, %arg3: memref<16x128xf32, #tpu.memory_space<vmem>>) attributes {dimension_semantics = [#tpu.dimension_semantics<parallel>], iteration_bounds = array<i64: 1>, scalar_prefetch = 0 : i64, scratch_operands = 0 : i64, tpu.core_type = #tpu.core_type<tc>, window_params = [{transform_indices = @transform_0, window_bounds = array<i64: 1, 1>}, {transform_indices = @transform_1, window_bounds = array<i64: 16, 128>}, {transform_indices = @transform_2, window_bounds = array<i64: 16, 128>}]} {
    %c0 = arith.constant 0 : index
    %c0_0 = arith.constant 0 : index
    %0 = vector.load %arg2[%c0, %c0_0] : memref<16x128xf32, #tpu.memory_space<vmem>>, vector<16x128xf32>
    %c0_1 = arith.constant 0 : index
    %c0_2 = arith.constant 0 : index
    %1 = memref.load %arg1[%c0_1, %c0_2] : memref<1x1xf32, #tpu.memory_space<smem>>
    %2 = vector.broadcast %1 : f32 to vector<16x128xf32>
    %3 = arith.addf %0, %2 : vector<16x128xf32>
    %c0_3 = arith.constant 0 : index
    %c0_4 = arith.constant 0 : index
    %4 = vector.load %arg3[%c0_3, %c0_4] : memref<16x128xf32, #tpu.memory_space<vmem>>, vector<16x128xf32>
    tpu.vector_store %arg3[%c0_3, %c0_4], %3 {strides = array<i32>} : memref<16x128xf32, #tpu.memory_space<vmem>>, vector<16x128xf32>,
    return
  }
  func.func @transform_0(%arg0: i32) -> (i32, i32) {
    %c0_i32 = arith.constant 0 : i32
    %c0_i32_0 = arith.constant 0 : i32
    %c0_i32_1 = arith.constant 0 : i32
    return %c0_i32, %c0_i32_0 : i32, i32
  }
  func.func @transform_1(%arg0: i32) -> (i32, i32) {
    %c0_i32 = arith.constant 0 : i32
    %c0_i32_0 = arith.constant 0 : i32
    return %arg0, %c0_i32 : i32, i32
  }
  func.func @transform_2(%arg0: i32) -> (i32, i32) {
    %c0_i32 = arith.constant 0 : i32
    %c0_i32_0 = arith.constant 0 : i32
    return %arg0, %c0_i32 : i32, i32
  }
}

</mosaic_0001>

<llo_original>
// kernel: tpu_custom_call.1
$region0: #{tpu_custom_call.1}
  #allocation0 [shape = 'u32[]', space=smem, size = 0x4, offset = 0x4, fixed_abs, tag = 'smem constant byte address 0x4 - core index']
  #allocation1 [shape = 'u32[144,128]{1,0:T(1,128)}', space=vmem, size = 0x12000, scoped, tag = 'internal scratch']
  #allocation2 [shape = 'f32[1,1]{1,0:T(1,128)S(6)}', space=smem, size = 0x200, scoped, tag = 'scoped memory for tpu_custom_call.1']
  %s0 = inlined_call_operand.<no memory space> [shape: f32[1,1], index: 0, kind: input, shape index: {}]
  %s1 = inlined_call_operand.hbm [shape: f32[16,128], index: 1, kind: input, shape index: {}]
  %s2 = inlined_call_operand.hbm [shape: f32[16,128], index: 2, kind: output, shape index: {}]
  %s3 = sld [smem:[#allocation0]]
  $region22: #{tpu_custom_call.1} parent=0
    _
  %s5 = ssub.s32 1, %s3
  %s6 = scalar_select 0, %s5, %s3
  %7 = sst [smem:[#allocation2]] %s0
  $region1: #{tpu_custom_call.1} parent=0
    #allocation3 [shape = 'u8[8192]{0}', space=vmem, size = 0x2000, scoped, tag = 'input window, operand 1, single buffered']
    #allocation4 [shape = 's32[1]{0}', space=sflag, size = 0x4, scoped, tag = 'scoped memory for tpu_custom_call.1']
    #allocation5 [shape = 's32[1]{0}', space=sflag, size = 0x4, scoped, tag = 'scoped memory for tpu_custom_call.1']
    #allocation6 [shape = 'u8[8192]{0}', space=vmem, size = 0x2000, scoped, tag = 'output window, operand 0, single buffered']
    %8 = vsyncpa [#allocation4], 0
    %9 = vsyncpa [#allocation5], 0
    // Predicated region
    $region2: #{tpu_custom_call.1} parent=1 // pred_check
      _
    $region3: #{tpu_custom_call.1} parent=1 // pred_check_branch
      %11 = sbr.rel (0) target = $region5
    $region4: #{tpu_custom_call.1} parent=1 // pred_region
      _
    $region5: #{tpu_custom_call.1} parent=1 // pred_fallthru
      _
    // Predicated region
    $region6: #{tpu_custom_call.1} parent=1 // pred_check
      _
    $region7: #{tpu_custom_call.1} parent=1 // pred_check_branch
      %13 = sbr.rel (0) target = $region9
    $region8: #{tpu_custom_call.1} parent=1 // pred_region
      %s15 = ssub.s32 256, 256
      %16 = vsyncadd [#allocation4], %s15
      %s17 = sshll.u32 [#allocation3], 4
      %s18 = int_to_ptr.vmem [resolvable:$true] %s17
      %23 = dma.hbm_to_vmem [thread:$0]  %s1, 256, %s18, [#allocation4], 128, 128, 8
    $region9: #{tpu_custom_call.1} parent=1 // pred_fallthru
      _
    // Predicated region
    $region10: #{tpu_custom_call.1} parent=1 // pred_check
      _
    $region11: #{tpu_custom_call.1} parent=1 // pred_check_branch
      %25 = sbr.rel (0) target = $region13
    $region12: #{tpu_custom_call.1} parent=1 // pred_region
      %26 = dma.done [#allocation4], 256
    $region13: #{tpu_custom_call.1} parent=1 // pred_fallthru
      _
    %v27 = vld [vmem:[#allocation3] sm:$0xff]
    %v28 = vld [vmem:[#allocation3 + $0x8] sm:$0xff]
    %s29 = sld [smem:[#allocation2]]
    %v30 = vstv %s29
    %v31 = vadd.f32 %v27, %v30
    %v32 = vadd.f32 %v28, %v30
    %33 = vst [vmem:[#allocation6] sm:$0xff] %v31
    %34 = vst [vmem:[#allocation6 + $0x8] sm:$0xff] %v32
    // Predicated region
    $region14: #{tpu_custom_call.1} parent=1 // pred_check
      _
    $region15: #{tpu_custom_call.1} parent=1 // pred_check_branch
      %36 = sbr.rel (0) target = $region17
    $region16: #{tpu_custom_call.1} parent=1 // pred_region
      %s38 = ssub.s32 256, 256
      %39 = vsyncadd [#allocation5], %s38
      %s40 = sshll.u32 [#allocation6], 4
      %s41 = int_to_ptr.vmem [resolvable:$true] %s40
      %46 = dma.vmem_to_hbm [thread:$0]  %s41, 256, %s2, [#allocation5], 128, 128, 8
    $region17: #{tpu_custom_call.1} parent=1 // pred_fallthru
      _
    // Predicated region
    $region18: #{tpu_custom_call.1} parent=1 // pred_check
      _
    $region19: #{tpu_custom_call.1} parent=1 // pred_check_branch
      %48 = sbr.rel (0) target = $region21
    $region20: #{tpu_custom_call.1} parent=1 // pred_region
      %49 = dma.done [#allocation5], 256
    $region21: #{tpu_custom_call.1} parent=1 // pred_fallthru
      _
    %50 = vsyncpa [#allocation4], 1
    %51 = vsyncpa [#allocation5], 1

</llo_original>
